<compile_context>
chip_gen: v5e
topology: v5e:2x2
jax: 0.10.0
libtpu: 0.0.40
codegen_flags: <defaults>
</compile_context>

<pallas_src>
import jax
import jax.numpy as jnp
from jax.experimental import pallas as pl
from jax.experimental.pallas import tpu as pltpu

FOCAL_ALPHA = 0.5
FOCAL_GAMMA = 2            # fixed integer exponent -> plain multiplies in-kernel
FOCAL_LOSS_COEF = 1.0 / 3
BBOX_LOSS_COEF = 1.0 / 3
GIOU_LOSS_COEF = 1.0 / 3
_EPS = 1e-6


def _matched_loss_kernel(logits_ref,   # VMEM (Bt, Cp, N)   logits, C on sublanes, queries N on lanes
                         w_ref,        # VMEM (Bt, 2*Cp, 1) folded [pos ; neg] class weights
                         pbox_ref,     # VMEM (Bt, 4, N)    pred boxes, xyxy coordinate rows
                         tbox_ref,     # VMEM (Bt, 4, 1)    target boxes, xyxy
                         out_ref):     # VMEM (1, 1, Bt)    per-image matched loss (lane-dense row)
    x = logits_ref[...]                                   # (Bt, Cp, N)
    w = w_ref[...]                                        # (Bt, 2*Cp, 1)
    cp = w.shape[1] // 2
    pw = w[:, :cp, :]                                     # (Bt, Cp, 1) aligned sublane slice
    nw = w[:, cp:, :]                                     # (Bt, Cp, 1)

    # ---- contrastive focal loss (stable log-sigmoid formulation) -----------
    e = jnp.exp(-jnp.abs(x))                              # in (0, 1]
    log1pe = jnp.log(1.0 + e)
    sp_x = jnp.maximum(x, 0.0) + log1pe                   # softplus(x)  = -log(1 - p)
    sp_nx = sp_x - x                                      # softplus(-x) = -log(p)
    p = jnp.where(x >= 0.0, 1.0, e) * pl.reciprocal(1.0 + e, approx=True)
    omp = 1.0 - p

    # weights already carry alpha/(1-alpha), focal_loss_coef and 1/label-count.
    focal_elem = pw * ((omp * omp) * sp_nx) + nw * ((p * p) * sp_x)   # (Bt, Cp, N)
    focal_row = jnp.sum(focal_elem, axis=1, keepdims=True)            # (Bt, 1, N)

    # ---- boxes: lane-dense (Bt, 1, N) coordinate rows ------------------------
    pb = pbox_ref[...]                                    # (Bt, 4, N)
    px1 = pb[:, 0:1, :]
    py1 = pb[:, 1:2, :]
    px2 = pb[:, 2:3, :]
    py2 = pb[:, 3:4, :]

    tb = tbox_ref[...]                                    # (Bt, 4, 1) -> hoisted broadcasts
    tx1 = tb[:, 0:1, :]
    ty1 = tb[:, 1:2, :]
    tx2 = tb[:, 2:3, :]
    ty2 = tb[:, 3:4, :]

    # ---- L1 bbox loss --------------------------------------------------------
    bbox_row = (jnp.abs(px1 - tx1) + jnp.abs(py1 - ty1)
                + jnp.abs(px2 - tx2) + jnp.abs(py2 - ty2))            # (Bt, 1, N)

    # ---- generalized IoU (reference adds raw GIoU, replicated) --------------
    area_p = (px2 - px1) * (py2 - py1)                                # (Bt, 1, N)
    area_t = (tx2 - tx1) * (ty2 - ty1)                                # (Bt, 1, 1)
    iw = jnp.maximum(jnp.minimum(px2, tx2) - jnp.maximum(px1, tx1), 0.0)
    ih = jnp.maximum(jnp.minimum(py2, ty2) - jnp.maximum(py1, ty1), 0.0)
    inter = iw * ih
    union = area_p + area_t - inter
    iou = inter * pl.reciprocal(union + _EPS, approx=True)
    ew = jnp.maximum(px2, tx2) - jnp.minimum(px1, tx1)
    eh = jnp.maximum(py2, ty2) - jnp.minimum(py1, ty1)
    area_c = ew * eh
    giou_row = iou - (area_c - union) * pl.reciprocal(area_c + _EPS, approx=True)

    # ---- total loss + fused matching (min over queries, M == 1) -------------
    total = focal_row + BBOX_LOSS_COEF * bbox_row + GIOU_LOSS_COEF * giou_row  # (Bt, 1, N)
    mins = jnp.min(total, axis=-1, keepdims=True)                              # (Bt, 1, 1)
    out_ref[...] = mins.reshape(out_ref.shape)                                 # (1, 1, Bt)


def contrastive_detection_loss(logits, pred_boxes, target_boxes, target_labels):
    B, N, C = logits.shape
    M = target_labels.shape[1]
    # TODO(synk): HungarianMatcher (scipy linear_sum_assignment) has no Pallas
    # equivalent; with a single target per image (M == 1) the assignment is fused
    # in-kernel as the per-image min of the total-loss map over queries.
    assert M == 1, "fused min-matching assumes a single target per image"
    # TODO(synk): paco_to_owl_box / metadata are not defined in the reference;
    # target boxes are assumed to already be in xyxy ("owl") coordinates.

    # Sublane axis only needs a multiple of 8 (C = 32 -> no padding at all).
    Cp = ((C + 7) // 8) * 8
    pad_c = Cp - C

    # Batch tiling: 2 parallel grid steps when B is even (keeps both v7x TensorCores
    # busy), Bt = B/2 images per step (amortizes per-step overhead for larger B).
    # TODO(synk): at production N/C add an N-tiling grid axis and set
    # vmem_limit_bytes so double-buffered blocks fit v7x's 32 MiB scoped VMEM.
    n_steps = 2 if (B >= 2 and B % 2 == 0) else 1
    Bt = B // n_steps

    logits = logits.astype(jnp.float32)
    labels = target_labels.astype(jnp.float32)[:, 0, :]               # (B, C)

    # Hoisted normalizers (guarded against all-zero label rows) and folded
    # constants alpha, (1 - alpha), focal_loss_coef.
    pos_cnt = jnp.maximum(jnp.sum(labels, axis=-1, keepdims=True), 1.0)
    neg_cnt = jnp.maximum(jnp.sum(1.0 - labels, axis=-1, keepdims=True), 1.0)
    pos_w = labels * (FOCAL_ALPHA * FOCAL_LOSS_COEF) / pos_cnt        # (B, C)
    neg_w = (1.0 - labels) * ((1.0 - FOCAL_ALPHA) * FOCAL_LOSS_COEF) / neg_cnt
    if pad_c:
        pos_w = jnp.pad(pos_w, ((0, 0), (0, pad_c)))
        neg_w = jnp.pad(neg_w, ((0, 0), (0, pad_c)))
    # Merge the two weight vectors into one input: (B, 2*Cp, 1).
    w = jnp.concatenate([pos_w, neg_w], axis=-1)[:, :, None]

    # Logits with queries N on lanes, C on sublanes (no 128-pad).  At toy sizes the
    # transpose is negligible; at production sizes keep natural (B, N, C) layout.
    logits_t = logits.transpose(0, 2, 1)                              # (B, C, N)
    if pad_c:
        logits_t = jnp.pad(logits_t, ((0, 0), (0, pad_c), (0, 0)))    # (B, Cp, N)

    # cxcywh -> xyxy in the wrapper (tiny tensor), then coordinate rows (B, 4, N).
    pb = pred_boxes.astype(jnp.float32)
    cxcy, wh = pb[..., 0:2], pb[..., 2:4]
    pb_xyxy = jnp.concatenate([cxcy - 0.5 * wh, cxcy + 0.5 * wh], axis=-1)   # (B, N, 4)
    pb_rows = pb_xyxy.transpose(0, 2, 1)                              # (B, 4, N)

    tb = target_boxes.astype(jnp.float32)[:, :, None]                 # (B, 4, 1)

    matched = pl.pallas_call(
        _matched_loss_kernel,
        out_shape=jax.ShapeDtypeStruct((n_steps, 1, Bt), jnp.float32),
        grid=(n_steps,),
        in_specs=[
            pl.BlockSpec((Bt, Cp, N), lambda s: (s, 0, 0)),
            pl.BlockSpec((Bt, 2 * Cp, 1), lambda s: (s, 0, 0)),
            pl.BlockSpec((Bt, 4, N), lambda s: (s, 0, 0)),
            pl.BlockSpec((Bt, 4, 1), lambda s: (s, 0, 0)),
        ],
        out_specs=pl.BlockSpec((1, 1, Bt), lambda s: (s, 0, 0)),
        compiler_params=pltpu.CompilerParams(
            dimension_semantics=("parallel",)),
    )(logits_t, w, pb_rows, tb)

    return jnp.mean(matched)


if __name__ == "__main__":
    key = jax.random.PRNGKey(0)
    k1, k2, k3, k4, k5 = jax.random.split(key, 5)

    B, N, C, M = 2, 16, 32, 1

    logits = jax.random.normal(k1, (B, N, C), dtype=jnp.float32)

    # pred boxes in cxcywh, well inside [0, 1]
    cxcy = jax.random.uniform(k2, (B, N, 2), minval=0.25, maxval=0.75)
    wh = jax.random.uniform(k3, (B, N, 2), minval=0.10, maxval=0.30)
    pred_boxes = jnp.concatenate([cxcy, wh], axis=-1).astype(jnp.float32)

    # target boxes in xyxy ("owl") coordinates, one per image
    t_cxcy = jax.random.uniform(k4, (B, 2), minval=0.3, maxval=0.7)
    t_wh = jax.random.uniform(k5, (B, 2), minval=0.1, maxval=0.3)
    target_boxes = jnp.concatenate(
        [t_cxcy - 0.5 * t_wh, t_cxcy + 0.5 * t_wh], axis=-1).astype(jnp.float32)

    # binary multi-hot labels; guarantee at least one positive and one negative
    labels = (jax.random.uniform(key, (B, M, C)) < 0.2).astype(jnp.float32)
    labels = labels.at[:, :, 0].set(1.0)
    labels = labels.at[:, :, 1].set(0.0)

    loss = contrastive_detection_loss(logits, pred_boxes, target_boxes, labels)
    jax.block_until_ready(loss)
    print("KERNEL_OK")
</pallas_src>

<mosaic_0001>
module attributes {stable_mosaic.version = 11 : i64} {
  func.func @_matched_loss_kernel(%arg0: i32, %arg1: memref<1x32x16xf32, #tpu.memory_space<vmem>>, %arg2: memref<1x64x1xf32, #tpu.memory_space<vmem>>, %arg3: memref<1x4x16xf32, #tpu.memory_space<vmem>>, %arg4: memref<1x4x1xf32, #tpu.memory_space<vmem>>, %arg5: memref<1x1x1xf32, #tpu.memory_space<vmem>>) attributes {dimension_semantics = [#tpu.dimension_semantics<parallel>], iteration_bounds = array<i64: 2>, scalar_prefetch = 0 : i64, scratch_operands = 0 : i64, tpu.core_type = #tpu.core_type<tc>, window_params = [{transform_indices = @transform_0, window_bounds = array<i64: 1, 32, 16>}, {transform_indices = @transform_1, window_bounds = array<i64: 1, 64, 1>}, {transform_indices = @transform_2, window_bounds = array<i64: 1, 4, 16>}, {transform_indices = @transform_3, window_bounds = array<i64: 1, 4, 1>}, {transform_indices = @transform_4, window_bounds = array<i64: 1, 1, 1>}]} {
    %c0 = arith.constant 0 : index
    %c0_0 = arith.constant 0 : index
    %c0_1 = arith.constant 0 : index
    %0 = vector.load %arg1[%c0, %c0_0, %c0_1] : memref<1x32x16xf32, #tpu.memory_space<vmem>>, vector<1x32x16xf32>
    %c0_2 = arith.constant 0 : index
    %c0_3 = arith.constant 0 : index
    %c0_4 = arith.constant 0 : index
    %1 = vector.load %arg2[%c0_2, %c0_3, %c0_4] : memref<1x64x1xf32, #tpu.memory_space<vmem>>, vector<1x64x1xf32>
    %2 = vector.extract_strided_slice %1 {offsets = [0, 0, 0], sizes = [1, 32, 1], strides = [1, 1, 1]} : vector<1x64x1xf32> to vector<1x32x1xf32>
    %3 = vector.extract_strided_slice %1 {offsets = [0, 32, 0], sizes = [1, 32, 1], strides = [1, 1, 1]} : vector<1x64x1xf32> to vector<1x32x1xf32>
    %4 = math.absf %0 : vector<1x32x16xf32>
    %cst = arith.constant 0.000000e+00 : f32
    %5 = vector.broadcast %cst : f32 to vector<1x32x16xf32>
    %6 = arith.subf %5, %4 : vector<1x32x16xf32>
    %7 = math.exp %6 : vector<1x32x16xf32>
    %cst_5 = arith.constant 1.000000e+00 : f32
    %8 = vector.broadcast %cst_5 : f32 to vector<1x32x16xf32>
    %9 = arith.addf %8, %7 : vector<1x32x16xf32>
    %10 = math.log %9 : vector<1x32x16xf32>
    %cst_6 = arith.constant 0.000000e+00 : f32
    %11 = vector.broadcast %cst_6 : f32 to vector<1x32x16xf32>
    %12 = arith.maximumf %0, %11 : vector<1x32x16xf32>
    %13 = arith.addf %12, %10 : vector<1x32x16xf32>
    %14 = arith.subf %13, %0 : vector<1x32x16xf32>
    %cst_7 = arith.constant 0.000000e+00 : f32
    %15 = vector.broadcast %cst_7 : f32 to vector<1x32x16xf32>
    %16 = arith.cmpf oge, %0, %15 : vector<1x32x16xf32>
    %cst_8 = arith.constant 1.000000e+00 : f32
    %17 = vector.broadcast %cst_8 : f32 to vector<1x32x16xf32>
    %18 = arith.select %16, %17, %7 : vector<1x32x16xi1>, vector<1x32x16xf32>
    %cst_9 = arith.constant 1.000000e+00 : f32
    %19 = vector.broadcast %cst_9 : f32 to vector<1x32x16xf32>
    %20 = arith.addf %19, %7 : vector<1x32x16xf32>
    %21 = tpu.reciprocal %20 {approx = true} : vector<1x32x16xf32> -> vector<1x32x16xf32>
    %22 = arith.mulf %18, %21 : vector<1x32x16xf32>
    %cst_10 = arith.constant 1.000000e+00 : f32
    %23 = vector.broadcast %cst_10 : f32 to vector<1x32x16xf32>
    %24 = arith.subf %23, %22 : vector<1x32x16xf32>
    %25 = arith.mulf %24, %24 : vector<1x32x16xf32>
    %26 = arith.mulf %25, %14 : vector<1x32x16xf32>
    %27 = vector.broadcast %2 : vector<1x32x1xf32> to vector<1x32x16xf32>
    %28 = arith.mulf %27, %26 : vector<1x32x16xf32>
    %29 = arith.mulf %22, %22 : vector<1x32x16xf32>
    %30 = arith.mulf %29, %13 : vector<1x32x16xf32>
    %31 = vector.broadcast %3 : vector<1x32x1xf32> to vector<1x32x16xf32>
    %32 = arith.mulf %31, %30 : vector<1x32x16xf32>
    %33 = arith.addf %28, %32 : vector<1x32x16xf32>
    %cst_11 = arith.constant dense<0.000000e+00> : vector<1x16xf32>
    %34 = vector.multi_reduction <add>, %33, %cst_11 [1] : vector<1x32x16xf32> to vector<1x16xf32>
    %35 = vector.shape_cast %34 : vector<1x16xf32> to vector<1x1x16xf32>
    %c0_12 = arith.constant 0 : index
    %c0_13 = arith.constant 0 : index
    %c0_14 = arith.constant 0 : index
    %36 = vector.load %arg3[%c0_12, %c0_13, %c0_14] : memref<1x4x16xf32, #tpu.memory_space<vmem>>, vector<1x4x16xf32>
    %37 = vector.extract_strided_slice %36 {offsets = [0, 0, 0], sizes = [1, 1, 16], strides = [1, 1, 1]} : vector<1x4x16xf32> to vector<1x1x16xf32>
    %38 = vector.extract_strided_slice %36 {offsets = [0, 1, 0], sizes = [1, 1, 16], strides = [1, 1, 1]} : vector<1x4x16xf32> to vector<1x1x16xf32>
    %39 = vector.extract_strided_slice %36 {offsets = [0, 2, 0], sizes = [1, 1, 16], strides = [1, 1, 1]} : vector<1x4x16xf32> to vector<1x1x16xf32>
    %40 = vector.extract_strided_slice %36 {offsets = [0, 3, 0], sizes = [1, 1, 16], strides = [1, 1, 1]} : vector<1x4x16xf32> to vector<1x1x16xf32>
    %c0_15 = arith.constant 0 : index
    %c0_16 = arith.constant 0 : index
    %c0_17 = arith.constant 0 : index
    %41 = vector.load %arg4[%c0_15, %c0_16, %c0_17] : memref<1x4x1xf32, #tpu.memory_space<vmem>>, vector<1x4x1xf32>
    %42 = vector.extract_strided_slice %41 {offsets = [0, 0, 0], sizes = [1, 1, 1], strides = [1, 1, 1]} : vector<1x4x1xf32> to vector<1x1x1xf32>
    %43 = vector.extract_strided_slice %41 {offsets = [0, 1, 0], sizes = [1, 1, 1], strides = [1, 1, 1]} : vector<1x4x1xf32> to vector<1x1x1xf32>
    %44 = vector.extract_strided_slice %41 {offsets = [0, 2, 0], sizes = [1, 1, 1], strides = [1, 1, 1]} : vector<1x4x1xf32> to vector<1x1x1xf32>
    %45 = vector.extract_strided_slice %41 {offsets = [0, 3, 0], sizes = [1, 1, 1], strides = [1, 1, 1]} : vector<1x4x1xf32> to vector<1x1x1xf32>
    %46 = vector.broadcast %42 : vector<1x1x1xf32> to vector<1x1x16xf32>
    %47 = arith.subf %37, %46 : vector<1x1x16xf32>
    %48 = math.absf %47 : vector<1x1x16xf32>
    %49 = vector.broadcast %43 : vector<1x1x1xf32> to vector<1x1x16xf32>
    %50 = arith.subf %38, %49 : vector<1x1x16xf32>
    %51 = math.absf %50 : vector<1x1x16xf32>
    %52 = arith.addf %48, %51 : vector<1x1x16xf32>
    %53 = vector.broadcast %44 : vector<1x1x1xf32> to vector<1x1x16xf32>
    %54 = arith.subf %39, %53 : vector<1x1x16xf32>
    %55 = math.absf %54 : vector<1x1x16xf32>
    %56 = arith.addf %52, %55 : vector<1x1x16xf32>
    %57 = vector.broadcast %45 : vector<1x1x1xf32> to vector<1x1x16xf32>
    %58 = arith.subf %40, %57 : vector<1x1x16xf32>
    %59 = math.absf %58 : vector<1x1x16xf32>
    %60 = arith.addf %56, %59 : vector<1x1x16xf32>
    %61 = arith.subf %39, %37 : vector<1x1x16xf32>
    %62 = arith.subf %40, %38 : vector<1x1x16xf32>
    %63 = arith.mulf %61, %62 : vector<1x1x16xf32>
    %64 = arith.subf %44, %42 : vector<1x1x1xf32>
    %65 = arith.subf %45, %43 : vector<1x1x1xf32>
    %66 = arith.mulf %64, %65 : vector<1x1x1xf32>
    %67 = vector.broadcast %44 : vector<1x1x1xf32> to vector<1x1x16xf32>
    %68 = arith.minimumf %39, %67 : vector<1x1x16xf32>
    %69 = vector.broadcast %42 : vector<1x1x1xf32> to vector<1x1x16xf32>
    %70 = arith.maximumf %37, %69 : vector<1x1x16xf32>
    %71 = arith.subf %68, %70 : vector<1x1x16xf32>
    %cst_18 = arith.constant 0.000000e+00 : f32
    %72 = vector.broadcast %cst_18 : f32 to vector<1x1x16xf32>
    %73 = arith.maximumf %71, %72 : vector<1x1x16xf32>
    %74 = vector.broadcast %45 : vector<1x1x1xf32> to vector<1x1x16xf32>
    %75 = arith.minimumf %40, %74 : vector<1x1x16xf32>
    %76 = vector.broadcast %43 : vector<1x1x1xf32> to vector<1x1x16xf32>
    %77 = arith.maximumf %38, %76 : vector<1x1x16xf32>
    %78 = arith.subf %75, %77 : vector<1x1x16xf32>
    %cst_19 = arith.constant 0.000000e+00 : f32
    %79 = vector.broadcast %cst_19 : f32 to vector<1x1x16xf32>
    %80 = arith.maximumf %78, %79 : vector<1x1x16xf32>
    %81 = arith.mulf %73, %80 : vector<1x1x16xf32>
    %82 = vector.broadcast %66 : vector<1x1x1xf32> to vector<1x1x16xf32>
    %83 = arith.addf %63, %82 : vector<1x1x16xf32>
    %84 = arith.subf %83, %81 : vector<1x1x16xf32>
    %cst_20 = arith.constant 9.99999997E-7 : f32
    %85 = vector.broadcast %cst_20 : f32 to vector<1x1x16xf32>
    %86 = arith.addf %84, %85 : vector<1x1x16xf32>
    %87 = tpu.reciprocal %86 {approx = true} : vector<1x1x16xf32> -> vector<1x1x16xf32>
    %88 = arith.mulf %81, %87 : vector<1x1x16xf32>
    %89 = vector.broadcast %44 : vector<1x1x1xf32> to vector<1x1x16xf32>
    %90 = arith.maximumf %39, %89 : vector<1x1x16xf32>
    %91 = vector.broadcast %42 : vector<1x1x1xf32> to vector<1x1x16xf32>
    %92 = arith.minimumf %37, %91 : vector<1x1x16xf32>
    %93 = arith.subf %90, %92 : vector<1x1x16xf32>
    %94 = vector.broadcast %45 : vector<1x1x1xf32> to vector<1x1x16xf32>
    %95 = arith.maximumf %40, %94 : vector<1x1x16xf32>
    %96 = vector.broadcast %43 : vector<1x1x1xf32> to vector<1x1x16xf32>
    %97 = arith.minimumf %38, %96 : vector<1x1x16xf32>
    %98 = arith.subf %95, %97 : vector<1x1x16xf32>
    %99 = arith.mulf %93, %98 : vector<1x1x16xf32>
    %100 = arith.subf %99, %84 : vector<1x1x16xf32>
    %cst_21 = arith.constant 9.99999997E-7 : f32
    %101 = vector.broadcast %cst_21 : f32 to vector<1x1x16xf32>
    %102 = arith.addf %99, %101 : vector<1x1x16xf32>
    %103 = tpu.reciprocal %102 {approx = true} : vector<1x1x16xf32> -> vector<1x1x16xf32>
    %104 = arith.mulf %100, %103 : vector<1x1x16xf32>
    %105 = arith.subf %88, %104 : vector<1x1x16xf32>
    %cst_22 = arith.constant 0.333333343 : f32
    %106 = vector.broadcast %cst_22 : f32 to vector<1x1x16xf32>
    %107 = arith.mulf %106, %60 : vector<1x1x16xf32>
    %108 = arith.addf %35, %107 : vector<1x1x16xf32>
    %cst_23 = arith.constant 0.333333343 : f32
    %109 = vector.broadcast %cst_23 : f32 to vector<1x1x16xf32>
    %110 = arith.mulf %109, %105 : vector<1x1x16xf32>
    %111 = arith.addf %108, %110 : vector<1x1x16xf32>
    %cst_24 = arith.constant dense<0x7F800000> : vector<1x1xf32>
    %112 = vector.multi_reduction <minimumf>, %111, %cst_24 [2] : vector<1x1x16xf32> to vector<1x1xf32>
    %113 = vector.shape_cast %112 : vector<1x1xf32> to vector<1x1x1xf32>
    %c0_25 = arith.constant 0 : index
    %c0_26 = arith.constant 0 : index
    %c0_27 = arith.constant 0 : index
    %114 = vector.load %arg5[%c0_25, %c0_26, %c0_27] : memref<1x1x1xf32, #tpu.memory_space<vmem>>, vector<1x1x1xf32>
    tpu.vector_store %arg5[%c0_25, %c0_26, %c0_27], %113 {strides = array<i32>} : memref<1x1x1xf32, #tpu.memory_space<vmem>>, vector<1x1x1xf32>,
    return
  }
  func.func @transform_0(%arg0: i32) -> (i32, i32, i32) {
    %c0_i32 = arith.constant 0 : i32
    %c0_i32_0 = arith.constant 0 : i32
    %c0_i32_1 = arith.constant 0 : i32
    return %arg0, %c0_i32, %c0_i32_0 : i32, i32, i32
  }
  func.func @transform_1(%arg0: i32) -> (i32, i32, i32) {
    %c0_i32 = arith.constant 0 : i32
    %c0_i32_0 = arith.constant 0 : i32
    %c0_i32_1 = arith.constant 0 : i32
    return %arg0, %c0_i32, %c0_i32_0 : i32, i32, i32
  }
  func.func @transform_2(%arg0: i32) -> (i32, i32, i32) {
    %c0_i32 = arith.constant 0 : i32
    %c0_i32_0 = arith.constant 0 : i32
    %c0_i32_1 = arith.constant 0 : i32
    return %arg0, %c0_i32, %c0_i32_0 : i32, i32, i32
  }
  func.func @transform_3(%arg0: i32) -> (i32, i32, i32) {
    %c0_i32 = arith.constant 0 : i32
    %c0_i32_0 = arith.constant 0 : i32
    %c0_i32_1 = arith.constant 0 : i32
    return %arg0, %c0_i32, %c0_i32_0 : i32, i32, i32
  }
  func.func @transform_4(%arg0: i32) -> (i32, i32, i32) {
    %c0_i32 = arith.constant 0 : i32
    %c0_i32_0 = arith.constant 0 : i32
    %c0_i32_1 = arith.constant 0 : i32
    return %arg0, %c0_i32, %c0_i32_0 : i32, i32, i32
  }
}

</mosaic_0001>

<llo_original>
// kernel: tpu_custom_call.1
$region0: #{tpu_custom_call.1}
  #allocation0 [shape = 'u32[]', space=smem, size = 0x4, offset = 0x4, fixed_abs, tag = 'smem constant byte address 0x4 - core index']
  #allocation1 [shape = 'u32[72,128]{1,0:T(1,128)}', space=vmem, size = 0x9000, scoped, tag = 'internal scratch']
  %s0 = inlined_call_operand.vmem [shape: f32[2,32,16], index: 0, kind: input, shape index: {}]
  %s1 = inlined_call_operand.vmem [shape: f32[2,64,1], index: 1, kind: input, shape index: {}]
  %s2 = inlined_call_operand.vmem [shape: f32[2,4,16], index: 2, kind: input, shape index: {}]
  %s3 = inlined_call_operand.vmem [shape: f32[2,4,1], index: 3, kind: input, shape index: {}]
  %s4 = inlined_call_operand.vmem [shape: f32[2,1,1], index: 4, kind: output, shape index: {}]
  %s5 = sld [smem:[#allocation0]]
  $region49: #{tpu_custom_call.1} parent=0
    _
  %s7 = ssub.s32 1, %s5
  %s8 = scalar_select 0, %s7, %s5
  loop: start=0, step=1, limit=4
  $region2: #{tpu_custom_call.1} parent=0 // loop_pre_header
    _
  $region3: #{tpu_custom_call.1} parent=0 // loop_header
    %s10 = sphi 0, %s14
    %p11 = scmp.ge.s32.totalorder %s10, 4
    %s20 = sphi 0, %s22
    %s23 = sphi 0, %s20
    %s24 = sphi 0, %s23
    %s40 = sphi 0, %s24
    %s46 = sphi 0, %s48
    %s49 = sphi 0, %s46
    %s50 = sphi 0, %s49
    %s66 = sphi 0, %s50
    %s72 = sphi 0, %s74
    %s75 = sphi 0, %s72
    %s76 = sphi 0, %s75
    %s92 = sphi 0, %s76
    %s98 = sphi 0, %s100
    %s101 = sphi 0, %s98
    %s102 = sphi 0, %s101
    %s118 = sphi 0, %s102
    %s124 = sphi 0, %s126
    %s127 = sphi 0, %s124
    %s128 = sphi 0, %s127
    %s144 = sphi 0, %s128
  $region4: #{tpu_custom_call.1} parent=0 // loop_header_branch
    %13 = sbr.rel (%p11) target = $region8
  $region5: #{tpu_custom_call.1} parent=0 // loop_body
    %s15 = ssub.s32 %s10, 1
    %s16 = ssub.s32 %s10, 2
    %s17 = sadd.s32 %s10, 1
    %s18 = ssub.s32 %s10, %s17
    %p19 = scmp.eq.s32.totalorder %s18, 0
    %s21 = sadd.s32 %s20, 1
    %s22 = scalar_select %p19, %s20, %s21
    %p25 = pneg %p19
    %p26 = scmp.eq.s32.totalorder %s10, 1
    %p27 = por %p25, %p26
    %p28 = scmp.ne.s32.totalorder %s20, %s23
    %p29 = scmp.eq.s32.totalorder %s10, 0
    %p30 = por %p28, %p29
    %p31 = scmp.ne.s32.totalorder %s20, %s23
    %p32 = scmp.eq.s32.totalorder %s15, 1
    %p33 = por %p31, %p32
    %p34 = scmp.ne.s32.totalorder %s23, %s24
    %p35 = scmp.eq.s32.totalorder %s15, 0
    %p36 = por %p34, %p35
    %p37 = scmp.ne.s32.totalorder %s23, %s24
    %p38 = scmp.eq.s32.totalorder %s16, 1
    %p39 = por %p37, %p38
    %p41 = scmp.ne.s32.totalorder %s24, %s40
    %p42 = scmp.eq.s32.totalorder %s16, 0
    %p43 = por %p41, %p42
    %s44 = ssub.s32 %s10, %s17
    %p45 = scmp.eq.s32.totalorder %s44, 0
    %s47 = sadd.s32 %s46, 1
    %s48 = scalar_select %p45, %s46, %s47
    %p51 = pneg %p45
    %p52 = scmp.eq.s32.totalorder %s10, 1
    %p53 = por %p51, %p52
    %p54 = scmp.ne.s32.totalorder %s46, %s49
    %p55 = scmp.eq.s32.totalorder %s10, 0
    %p56 = por %p54, %p55
    %p57 = scmp.ne.s32.totalorder %s46, %s49
    %p58 = scmp.eq.s32.totalorder %s15, 1
    %p59 = por %p57, %p58
    %p60 = scmp.ne.s32.totalorder %s49, %s50
    %p61 = scmp.eq.s32.totalorder %s15, 0
    %p62 = por %p60, %p61
    %p63 = scmp.ne.s32.totalorder %s49, %s50
    %p64 = scmp.eq.s32.totalorder %s16, 1
    %p65 = por %p63, %p64
    %p67 = scmp.ne.s32.totalorder %s50, %s66
    %p68 = scmp.eq.s32.totalorder %s16, 0
    %p69 = por %p67, %p68
    %s70 = ssub.s32 %s10, %s17
    %p71 = scmp.eq.s32.totalorder %s70, 0
    %s73 = sadd.s32 %s72, 1
    %s74 = scalar_select %p71, %s72, %s73
    %p77 = pneg %p71
    %p78 = scmp.eq.s32.totalorder %s10, 1
    %p79 = por %p77, %p78
    %p80 = scmp.ne.s32.totalorder %s72, %s75
    %p81 = scmp.eq.s32.totalorder %s10, 0
    %p82 = por %p80, %p81
    %p83 = scmp.ne.s32.totalorder %s72, %s75
    %p84 = scmp.eq.s32.totalorder %s15, 1
    %p85 = por %p83, %p84
    %p86 = scmp.ne.s32.totalorder %s75, %s76
    %p87 = scmp.eq.s32.totalorder %s15, 0
    %p88 = por %p86, %p87
    %p89 = scmp.ne.s32.totalorder %s75, %s76
    %p90 = scmp.eq.s32.totalorder %s16, 1
    %p91 = por %p89, %p90
    %p93 = scmp.ne.s32.totalorder %s76, %s92
    %p94 = scmp.eq.s32.totalorder %s16, 0
    %p95 = por %p93, %p94
    %s96 = ssub.s32 %s10, %s17
    %p97 = scmp.eq.s32.totalorder %s96, 0
    %s99 = sadd.s32 %s98, 1
    %s100 = scalar_select %p97, %s98, %s99
    %p103 = pneg %p97
    %p104 = scmp.eq.s32.totalorder %s10, 1
    %p105 = por %p103, %p104
    %p106 = scmp.ne.s32.totalorder %s98, %s101
    %p107 = scmp.eq.s32.totalorder %s10, 0
    %p108 = por %p106, %p107
    %p109 = scmp.ne.s32.totalorder %s98, %s101
    %p110 = scmp.eq.s32.totalorder %s15, 1
    %p111 = por %p109, %p110
    %p112 = scmp.ne.s32.totalorder %s101, %s102
    %p113 = scmp.eq.s32.totalorder %s15, 0
    %p114 = por %p112, %p113
    %p115 = scmp.ne.s32.totalorder %s101, %s102
    %p116 = scmp.eq.s32.totalorder %s16, 1
    %p117 = por %p115, %p116
    %p119 = scmp.ne.s32.totalorder %s102, %s118
    %p120 = scmp.eq.s32.totalorder %s16, 0
    %p121 = por %p119, %p120
    %s122 = ssub.s32 %s10, %s17
    %p123 = scmp.eq.s32.totalorder %s122, 0
    %s125 = sadd.s32 %s124, 1
    %s126 = scalar_select %p123, %s124, %s125
    %p129 = pneg %p123
    %p130 = scmp.eq.s32.totalorder %s10, 1
    %p131 = por %p129, %p130
    %p132 = scmp.ne.s32.totalorder %s124, %s127
    %p133 = scmp.eq.s32.totalorder %s10, 0
    %p134 = por %p132, %p133
    %p135 = scmp.ne.s32.totalorder %s124, %s127
    %p136 = scmp.eq.s32.totalorder %s15, 1
    %p137 = por %p135, %p136
    %p138 = scmp.ne.s32.totalorder %s127, %s128
    %p139 = scmp.eq.s32.totalorder %s15, 0
    %p140 = por %p138, %p139
    %p141 = scmp.ne.s32.totalorder %s127, %s128
    %p142 = scmp.eq.s32.totalorder %s16, 1
    %p143 = por %p141, %p142
    %p145 = scmp.ne.s32.totalorder %s128, %s144
    %p146 = scmp.eq.s32.totalorder %s16, 0
    %p147 = por %p145, %p146
    %p148 = scmp.le.s32.totalorder 1, %s10
    %p149 = scmp.lt.s32.totalorder %s10, 3
    %p150 = pnand %p148, %p149
    %p151 = pneg %p150
    // Predicated region
    $region9: #{tpu_custom_call.1} parent=5 // pred_check
      _
    $region10: #{tpu_custom_call.1} parent=5 // pred_check_branch
      %153 = sbr.rel (%p150) target = $region12
    $region11: #{tpu_custom_call.1} parent=5 // pred_region
      %s154 = ssub.s32 %s10, 1
    $region12: #{tpu_custom_call.1} parent=5 // pred_fallthru
      _
    %p155 = scmp.lt.s32.totalorder %s10, 2
    // Predicated region
    $region13: #{tpu_custom_call.1} parent=5 // pred_check
      %p156 = pneg %p155
    $region14: #{tpu_custom_call.1} parent=5 // pred_check_branch
      %158 = sbr.rel (%p156) target = $region16
    $region15: #{tpu_custom_call.1} parent=5 // pred_region
      // Predicated region
      $region17: #{tpu_custom_call.1} parent=15 // pred_check
        %p159 = pneg %p30
      $region18: #{tpu_custom_call.1} parent=15 // pred_check_branch
        %161 = sbr.rel (%p159) target = $region20
      $region19: #{tpu_custom_call.1} parent=15 // pred_region
        %p162 = scmp.lt.s32.totalorder %s10, 1
        %s163 = scalar_select %p162, %s10, 1
        %s164 = smul.addr %s163, 4
        %s165 = smul.addr %s164, 8
        %s166 = scalar_lea.vmem %s0, %s165
      $region20: #{tpu_custom_call.1} parent=15 // pred_fallthru
        _
      // Predicated region
      $region21: #{tpu_custom_call.1} parent=15 // pred_check
        %p167 = pneg %p56
      $region22: #{tpu_custom_call.1} parent=15 // pred_check_branch
        %169 = sbr.rel (%p167) target = $region24
      $region23: #{tpu_custom_call.1} parent=15 // pred_region
        %p170 = scmp.lt.s32.totalorder %s10, 1
        %s171 = scalar_select %p170, %s10, 1
        %s172 = smul.addr %s171, 8
        %s173 = smul.addr %s172, 8
        %s174 = scalar_lea.vmem %s1, %s173
      $region24: #{tpu_custom_call.1} parent=15 // pred_fallthru
        _
      // Predicated region
      $region25: #{tpu_custom_call.1} parent=15 // pred_check
        %p175 = pneg %p82
      $region26: #{tpu_custom_call.1} parent=15 // pred_check_branch
        %177 = sbr.rel (%p175) target = $region28
      $region27: #{tpu_custom_call.1} parent=15 // pred_region
        %p178 = scmp.lt.s32.totalorder %s10, 1
        %s179 = scalar_select %p178, %s10, 1
        %s180 = smul.addr %s179, 4
        %s181 = scalar_lea.vmem %s2, %s180
      $region28: #{tpu_custom_call.1} parent=15 // pred_fallthru
        _
      // Predicated region
      $region29: #{tpu_custom_call.1} parent=15 // pred_check
        %p182 = pneg %p108
      $region30: #{tpu_custom_call.1} parent=15 // pred_check_branch
        %184 = sbr.rel (%p182) target = $region32
      $region31: #{tpu_custom_call.1} parent=15 // pred_region
        %p185 = scmp.lt.s32.totalorder %s10, 1
        %s186 = scalar_select %p185, %s10, 1
        %s187 = smul.addr %s186, 4
        %s188 = scalar_lea.vmem %s3, %s187
      $region32: #{tpu_custom_call.1} parent=15 // pred_fallthru
        _
    $region16: #{tpu_custom_call.1} parent=5 // pred_fallthru
      _
    %p189 = scmp.le.s32.totalorder 1, %s10
    %p190 = scmp.lt.s32.totalorder %s10, 3
    %p191 = pnand %p189, %p190
    %p192 = pneg %p191
    // Predicated region
    $region33: #{tpu_custom_call.1} parent=5 // pred_check
      _
    $region34: #{tpu_custom_call.1} parent=5 // pred_check_branch
      %194 = sbr.rel (%p191) target = $region36
    $region35: #{tpu_custom_call.1} parent=5 // pred_region
      %s195 = ssub.s32 %s10, 1
      %p196 = scmp.lt.s32.totalorder %s15, 1
      %s197 = scalar_select %p196, %s15, 1
      %s198 = smul.addr %s197, 4
      %s199 = smul.addr %s198, 8
      %s200 = scalar_lea.vmem %s0, %s199
      %p201 = pneg %p36
      %p202 = pneg %p33
      %p203 = scmp.lt.s32.totalorder %s15, 1
      %s204 = scalar_select %p203, %s15, 1
      %s205 = smul.addr %s204, 8
      %s206 = smul.addr %s205, 8
      %s207 = scalar_lea.vmem %s1, %s206
      %p208 = pneg %p62
      %p209 = pneg %p59
      %p210 = scmp.lt.s32.totalorder %s15, 1
      %s211 = scalar_select %p210, %s15, 1
      %s212 = smul.addr %s211, 4
      %s213 = scalar_lea.vmem %s2, %s212
      %p214 = pneg %p88
      %p215 = pneg %p85
      %p216 = scmp.lt.s32.totalorder %s15, 1
      %s217 = scalar_select %p216, %s15, 1
      %s218 = smul.addr %s217, 4
      %s219 = scalar_lea.vmem %s3, %s218
      %p220 = pneg %p114
      %p221 = pneg %p111
      %p222 = pneg %p140
      %p223 = pneg %p137
      %p224 = scmp.lt.s32.totalorder %s15, 1
      %s225 = scalar_select %p224, %s15, 1
      %s226 = scalar_lea.vmem %s4, %s225
      %p227 = scmp.lt.s32.totalorder %s15, 1
      %s228 = scalar_select %p227, %s15, 1
      %s229 = smul.addr %s228, 4
      %s230 = smul.addr %s229, 8
      %s231 = scalar_lea.vmem %s0, %s230
      %p232 = scmp.lt.s32.totalorder %s15, 1
      %s233 = scalar_select %p232, %s15, 1
      %s234 = smul.addr %s233, 8
      %s235 = smul.addr %s234, 8
      %s236 = scalar_lea.vmem %s1, %s235
      %p237 = scmp.lt.s32.totalorder %s15, 1
      %s238 = scalar_select %p237, %s15, 1
      %s239 = smul.addr %s238, 4
      %s240 = scalar_lea.vmem %s2, %s239
      %p241 = scmp.lt.s32.totalorder %s15, 1
      %s242 = scalar_select %p241, %s15, 1
      %s243 = smul.addr %s242, 4
      %s244 = scalar_lea.vmem %s3, %s243
      %p245 = scmp.lt.s32.totalorder %s15, 1
      %s246 = scalar_select %p245, %s15, 1
      %s247 = scalar_lea.vmem %s4, %s246
      %v248 = vld [vmem:[%s231] sm:$0xff]
      %v249 = vld [vmem:[%s231 + $0x8] sm:$0xff]
      %v250 = vld [vmem:[%s231 + $0x10] sm:$0xff]
      %v251 = vld [vmem:[%s231 + $0x18] sm:$0xff]
      %v252 = vld [vmem:[%s236] sm:$0xff]
      %v253 = vld [vmem:[%s236 + $0x8] sm:$0xff]
      %v254 = vld [vmem:[%s236 + $0x10] sm:$0xff]
      %v255 = vld [vmem:[%s236 + $0x18] sm:$0xff]
      %v256 = vld [vmem:[%s236 + $0x20] sm:$0xff]
      %v257 = vld [vmem:[%s236 + $0x28] sm:$0xff]
      %v258 = vld [vmem:[%s236 + $0x30] sm:$0xff]
      %v259 = vld [vmem:[%s236 + $0x38] sm:$0xff]
      %v260 = vand.u32 2147483647, %v248
      %v261 = vand.u32 2147483647, %v249
      %v262 = vand.u32 2147483647, %v250
      %v263 = vand.u32 2147483647, %v251
      %v264 = vsub.f32 0.0, %v260
      %v265 = vsub.f32 0.0, %v261
      %v266 = vsub.f32 0.0, %v262
      %v267 = vsub.f32 0.0, %v263
      %v268 = vmul.f32 %v264, 1.442695
      %v269 = vpow.pop %v268
      %v270 = vmul.f32 %v265, 1.442695
      %v271 = vpow.pop %v270
      %v272 = vmul.f32 %v266, 1.442695
      %v273 = vpow.pop %v272
      %v274 = vmul.f32 %v267, 1.442695
      %v275 = vpow.pop %v274
      %v276 = vadd.f32 %v269, 1.0
      %v277 = vadd.f32 %v271, 1.0
      %v278 = vadd.f32 %v273, 1.0
      %v279 = vadd.f32 %v275, 1.0
      %v280 = vlog2.pop %v276
      %v281 = vmul.f32 %v280, 0.6931472
      %v282 = vlog2.pop %v277
      %v283 = vmul.f32 %v282, 0.6931472
      %v284 = vlog2.pop %v278
      %v285 = vmul.f32 %v284, 0.6931472
      %v286 = vlog2.pop %v279
      %v287 = vmul.f32 %v286, 0.6931472
      %v288 = vmax.f32 %v248, 0.0
      %v289 = vmax.f32 %v249, 0.0
      %v290 = vmax.f32 %v250, 0.0
      %v291 = vmax.f32 %v251, 0.0
      %v292 = vadd.f32 %v288, %v281
      %v293 = vadd.f32 %v289, %v283
      %v294 = vadd.f32 %v290, %v285
      %v295 = vadd.f32 %v291, %v287
      %v296 = vsub.f32 %v292, %v248
      %v297 = vsub.f32 %v293, %v249
      %v298 = vsub.f32 %v294, %v250
      %v299 = vsub.f32 %v295, %v251
      %vm300 = vcmp.ge.f32.partialorder %v248, 0.0
      %vm301 = vcmp.ge.f32.partialorder %v249, 0.0
      %vm302 = vcmp.ge.f32.partialorder %v250, 0.0
      %vm303 = vcmp.ge.f32.partialorder %v251, 0.0
      %v304 = vsel %vm300, 1.0, %v269
      %v305 = vsel %vm301, 1.0, %v271
      %v306 = vsel %vm302, 1.0, %v273
      %v307 = vsel %vm303, 1.0, %v275
      %v308 = vrcp.pop %v276
      %v309 = vrcp.pop %v277
      %v310 = vrcp.pop %v278
      %v311 = vrcp.pop %v279
      %v312 = vmul.f32 %v304, %v308
      %v313 = vmul.f32 %v305, %v309
      %v314 = vmul.f32 %v306, %v310
      %v315 = vmul.f32 %v307, %v311
      %v316 = vsub.f32 1.0, %v312
      %v317 = vsub.f32 1.0, %v313
      %v318 = vsub.f32 1.0, %v314
      %v319 = vsub.f32 1.0, %v315
      %v320 = vmul.f32 %v316, %v316
      %v321 = vmul.f32 %v317, %v317
      %v322 = vmul.f32 %v318, %v318
      %v323 = vmul.f32 %v319, %v319
      %v324 = vmul.f32 %v320, %v296
      %v325 = vmul.f32 %v321, %v297
      %v326 = vmul.f32 %v322, %v298
      %v327 = vmul.f32 %v323, %v299
      %329 = vset.pattern.permute.xlu0 0
      %330 = vperm.xlu0 %329, %v252
      %v331 = vpop.permute.xlu0 %330
      %334 = vset.pattern.permute.xlu0 0
      %335 = vperm.xlu0 %334, %v253
      %v336 = vpop.permute.xlu0 %335
      %339 = vset.pattern.permute.xlu0 0
      %340 = vperm.xlu0 %339, %v254
      %v341 = vpop.permute.xlu0 %340
      %344 = vset.pattern.permute.xlu0 0
      %345 = vperm.xlu0 %344, %v255
      %v346 = vpop.permute.xlu0 %345
      %v348 = vmul.f32 %v331, %v324
      %v349 = vmul.f32 %v336, %v325
      %v350 = vmul.f32 %v341, %v326
      %v351 = vmul.f32 %v346, %v327
      %v352 = vmul.f32 %v312, %v312
      %v353 = vmul.f32 %v313, %v313
      %v354 = vmul.f32 %v314, %v314
      %v355 = vmul.f32 %v315, %v315
      %v356 = vmul.f32 %v352, %v292
      %v357 = vmul.f32 %v353, %v293
      %v358 = vmul.f32 %v354, %v294
      %v359 = vmul.f32 %v355, %v295
      %361 = vset.pattern.permute.xlu0 0
      %362 = vperm.xlu0 %361, %v256
      %v363 = vpop.permute.xlu0 %362
      %366 = vset.pattern.permute.xlu0 0
      %367 = vperm.xlu0 %366, %v257
      %v368 = vpop.permute.xlu0 %367
      %371 = vset.pattern.permute.xlu0 0
      %372 = vperm.xlu0 %371, %v258
      %v373 = vpop.permute.xlu0 %372
      %376 = vset.pattern.permute.xlu0 0
      %377 = vperm.xlu0 %376, %v259
      %v378 = vpop.permute.xlu0 %377
      %v380 = vmul.f32 %v363, %v356
      %v381 = vmul.f32 %v368, %v357
      %v382 = vmul.f32 %v373, %v358
      %v383 = vmul.f32 %v378, %v359
      %v384 = vadd.f32 %v348, %v380
      %v385 = vadd.f32 %v349, %v381
      %v386 = vadd.f32 %v350, %v382
      %v387 = vadd.f32 %v351, %v383
      %vm388 = vcmask 130048
      %v389 = vsel %vm388, %v384, 0.0
      %v390 = vsel %vm388, %v385, 0.0
      %v391 = vadd.f32 %v389, %v390
      %v392 = vsel %vm388, %v386, 0.0
      %v393 = vadd.f32 %v391, %v392
      %v394 = vsel %vm388, %v387, 0.0
      %v395 = vadd.f32 %v393, %v394
      %v396 = vrot.slane %v395, 4
      %v397 = vadd.f32 %v395, %v396
      %v398 = vrot.slane %v397, 2
      %v399 = vadd.f32 %v397, %v398
      %v400 = vrot.slane %v399, 1
      %v401 = vadd.f32 %v399, %v400
      %v402 = vld [vmem:[%s240] sm:$0xf]
      %v403 = vld [vmem:[%s244] sm:$0xf]
      %405 = vset.pattern.permute.xlu0 0
      %406 = vperm.xlu0 %405, %v403
      %v407 = vpop.permute.xlu0 %406
      %v409 = vsub.f32 %v402, %v407
      %v410 = vand.u32 2147483647, %v409
      %v412 = vrot.slane %v410, 1
      %v414 = vadd.f32 %v410, %v412
      %v415 = vrot.slane %v410, 2
      %v417 = vadd.f32 %v414, %v415
      %v418 = vrot.slane %v410, 3
      %v420 = vadd.f32 %v417, %v418
      %v422 = vrot.slane %v402, 6
      %v424 = vsub.f32 %v402, %v422
      %v426 = vrot.slane %v424, 1
      %v428 = vmul.f32 %v424, %v426
      %v429 = vrot.slane %v403, 6
      %v431 = vsub.f32 %v403, %v429
      %v433 = vrot.slane %v431, 1
      %v435 = vmul.f32 %v431, %v433
      %v436 = vmin.f32 %v402, %v407
      %v437 = vmax.f32 %v402, %v407
      %v439 = vrot.slane %v437, 6
      %v441 = vsub.f32 %v436, %v439
      %v442 = vmax.f32 %v441, 0.0
      %v444 = vrot.slane %v442, 1
      %v446 = vmul.f32 %v442, %v444
      %448 = vset.pattern.permute.xlu0 0
      %449 = vperm.xlu0 %448, %v435
      %v450 = vpop.permute.xlu0 %449
      %v452 = vadd.f32 %v428, %v450
      %v453 = vsub.f32 %v452, %v446
      %v454 = vadd.f32 %v453, 1e-06
      %v455 = vrcp.pop %v454
      %v456 = vmul.f32 %v446, %v455
      %v458 = vrot.slane %v436, 6
      %v460 = vsub.f32 %v437, %v458
      %v462 = vrot.slane %v460, 1
      %v464 = vmul.f32 %v460, %v462
      %v465 = vsub.f32 %v464, %v453
      %v466 = vadd.f32 %v464, 1e-06
      %v467 = vrcp.pop %v466
      %v468 = vmul.f32 %v465, %v467
      %v469 = vsub.f32 %v456, %v468
      %v470 = vmul.f32 %v420, 0.33333334
      %v471 = vadd.f32 %v401, %v470
      %v472 = vmul.f32 %v469, 0.33333334
      %v474 = vrot.slane %v472, 2
      %v476 = vadd.f32 %v471, %v474
      %vm477 = vcmask 122880
      %v478 = vsel %vm477, %v476, inf
      %479 = vmin.xlane.f32.xlu0 %v478
      %v480 = vpop.xlane.xlu0 %479
      %vm481 = vcmask 0
      %482 = vst.msk [vmem:[%s247] sm:$0x1] %vm481, %v480
      %p483 = scmp.lt.s32.totalorder %s15, 1
      %s484 = scalar_select %p483, %s15, 1
      %s485 = scalar_lea.vmem %s4, %s484
      // Predicated region
      $region37: #{tpu_custom_call.1} parent=35 // pred_check
        %p486 = pneg %p137
      $region38: #{tpu_custom_call.1} parent=35 // pred_check_branch
        %488 = sbr.rel (%p486) target = $region40
      $region39: #{tpu_custom_call.1} parent=35 // pred_region
        _
      $region40: #{tpu_custom_call.1} parent=35 // pred_fallthru
        _
    $region36: #{tpu_custom_call.1} parent=5 // pred_fallthru
      _
    %p489 = scmp.le.s32.totalorder 2, %s10
    // Predicated region
    $region41: #{tpu_custom_call.1} parent=5 // pred_check
      %p490 = pneg %p489
    $region42: #{tpu_custom_call.1} parent=5 // pred_check_branch
      %492 = sbr.rel (%p490) target = $region44
    $region43: #{tpu_custom_call.1} parent=5 // pred_region
      %s493 = ssub.s32 %s10, 2
      // Predicated region
      $region45: #{tpu_custom_call.1} parent=43 // pred_check
        %p494 = pneg %p143
      $region46: #{tpu_custom_call.1} parent=43 // pred_check_branch
        %496 = sbr.rel (%p494) target = $region48
      $region47: #{tpu_custom_call.1} parent=43 // pred_region
        %p497 = scmp.lt.s32.totalorder %s16, 1
        %s498 = scalar_select %p497, %s16, 1
        %s499 = scalar_lea.vmem %s4, %s498
      $region48: #{tpu_custom_call.1} parent=43 // pred_fallthru
        _
    $region44: #{tpu_custom_call.1} parent=5 // pred_fallthru
      _
  $region6: #{tpu_custom_call.1} parent=0 // loop_footer
    %s14 = sadd.s32 1, %s10
  $region7: #{tpu_custom_call.1} parent=0 // loop_footer_branch
    %9 = sbr.rel target = $region3
  $region8: #{tpu_custom_call.1} parent=0 // loop_exit
    _

</llo_original>
